<compile_context>
chip_gen: v7x
topology: tpu7x:2x2x1
jax: 0.10.0
libtpu: 0.0.40
codegen_flags: <defaults>
</compile_context>

<pallas_src>
import functools
import math

import jax
import jax.numpy as jnp
from jax import lax
from jax.experimental import pallas as pl
from jax.experimental.pallas import tpu as pltpu

FEAT_DIM = 128
IN_DIM = 160
_LANE = 128
_MAX_SINGLE_BLOCK_ROWS = 8192  # comfortably within 32 MiB scoped VMEM on all gens


def _softplus(x):
    # torch.nn.Softplus (beta=1, threshold=20):  x            if x > 20
    #                                            log1p(exp(x)) otherwise
    # Written as max(x,0) + log1p(exp(-|x|)) with a small-argument series so the
    # f32 (1 + u) never collapses to 1, without needing a log1p primitive.
    u = jnp.exp(-jnp.abs(x))
    log1pu = jnp.where(u < 1e-4, u * (1.0 - 0.5 * u), jnp.log(1.0 + u))
    return jnp.where(x > 20.0, x, jnp.maximum(x, 0.0) + log1pu)


def _ppl_kernel(x_ref, w_ref, c_ref, lab_ref,
                scores_ref, dist_ref, loss_ref,
                *, r_real, r_fake, alpha_g, alpha_s, n_valid):
    x = x_ref[...]          # (Bp, 160)  bf16
    w = w_ref[...]          # (160, 128) bf16, fc weight pre-transposed
    c = c_ref[...]          # (1, 128)   f32 center parameter
    lab = lab_ref[...]      # (1, Bp)    int32; -1 marks padding / "no label"

    # fc: x @ W^T on the MXU with f32 accumulation.
    h = jnp.dot(x, w, preferred_element_type=jnp.float32)            # (Bp, 128)

    # Per-row squared L2 norm as a lane-dense (1, Bp) row via an M=1 MXU matmul
    # (contract the 128 feature lanes) instead of per-row XLU reductions.
    ones_row = jnp.ones((1, h.shape[-1]), jnp.float32)
    sumsq = lax.dot_general(ones_row, h * h, (((1,), (1,)), ((), ())),
                            preferred_element_type=jnp.float32)      # (1, Bp)
    # 1 / max(||h||, 1e-12)  (torch F.normalize eps) via EUP rsqrt.
    inv_norm = lax.rsqrt(jnp.maximum(sumsq, 1e-24))                   # (1, Bp)

    # Normalized center.
    c_ss = jnp.sum(c * c, axis=-1, keepdims=True)                     # (1, 1)
    wn = c * lax.rsqrt(jnp.maximum(c_ss, 1e-24))                      # (1, 128)

    # scores = normalize(h) @ wn^T, lane dense: (wn @ h^T) * inv_norm.
    s = lax.dot_general(wn, h, (((1,), (1,)), ((), ())),
                        preferred_element_type=jnp.float32) * inv_norm  # (1, Bp)
    scores_ref[...] = s                                               # output_scores

    is_real = lab == 1
    is_fake = lab == 0
    valid = jnp.logical_or(is_real, is_fake)

    # scores[labels==1] = alpha_g*(r_real - s); scores[labels==0] = alpha_s*(s - r_fake)
    mod = jnp.where(is_real, alpha_g * (r_real - s),
                    jnp.where(is_fake, alpha_s * (s - r_fake), s))
    sp = jnp.where(valid, _softplus(mod), 0.0)
    # mean over the un-padded batch (== torch nanmean for finite scores)
    loss_ref[...] = jnp.sum(sp, axis=1, keepdims=True) * (1.0 / n_valid)

    # Spoof center: sum of normalized fake rows as a (1,Bp) x (Bp,128) MXU matmul.
    # The 1/n_fake mean factor is skipped — it cancels in the re-normalization.
    fmask = is_fake.astype(jnp.float32)                                # (1, Bp)
    spo = lax.dot_general(fmask * inv_norm, h, (((1,), (0,)), ((), ())),
                          preferred_element_type=jnp.float32)          # (1, 128)
    spo_ss = jnp.sum(spo * spo, axis=-1, keepdims=True)
    spo_n = spo * lax.rsqrt(jnp.maximum(spo_ss, 1e-24))                # (1, 128)

    # dist = normalize(h) @ spo_center^T, lane dense; fake-row masking in wrapper.
    dist_ref[...] = lax.dot_general(spo_n, h, (((1,), (1,)), ((), ())),
                                    preferred_element_type=jnp.float32) * inv_norm


def prepare_fc_weight(fc_weight):
    """One-time prep: nn.Linear weight (feat_dim, in_dim) -> (in_dim, feat_dim) bf16.

    Done once outside the per-step hot path so no transpose/cast op runs per call.
    """
    return jnp.asarray(fc_weight).T.astype(jnp.bfloat16)


def ppl_loss_forward(x, labels, fc_weight_t, center,
                     r_real=0.5, r_fake=0.2, alpha_g=20.0, alpha_s=20.0):
    B, in_dim = x.shape
    Bp = max(_LANE, ((B + _LANE - 1) // _LANE) * _LANE)

    if Bp > _MAX_SINGLE_BLOCK_ROWS:
        # TODO(synk): for very large batches (esp. v7x: 64 MiB VMEM/TC, 2 TCs) tile the
        # batch over a "parallel" grid with a second per-tile pass for dist instead of
        # processing the whole batch as one block.
        raise NotImplementedError("ppl_loss kernel: batch too large for single-block path")

    # bf16 inputs halve the dominant x DMA; accumulation and post-matmul math stay f32.
    xp = jnp.pad(x.astype(jnp.bfloat16), ((0, Bp - B), (0, 0)))
    if labels is None:
        lab_row = jnp.full((1, Bp), -1, jnp.int32)
    else:
        lab_row = jnp.pad(labels.astype(jnp.int32).reshape(B), (0, Bp - B),
                          constant_values=-1).reshape(1, Bp)

    kernel = functools.partial(_ppl_kernel, r_real=r_real, r_fake=r_fake,
                               alpha_g=alpha_g, alpha_s=alpha_s, n_valid=float(B))

    scores, dist, loss = pl.pallas_call(
        kernel,
        in_specs=[pl.BlockSpec(memory_space=pltpu.MemorySpace.VMEM)] * 4,
        out_specs=(pl.BlockSpec(memory_space=pltpu.MemorySpace.VMEM),
                   pl.BlockSpec(memory_space=pltpu.MemorySpace.VMEM),
                   pl.BlockSpec(memory_space=pltpu.MemorySpace.VMEM)),
        out_shape=(
            jax.ShapeDtypeStruct((1, Bp), jnp.float32),   # scores (lane-dense row)
            jax.ShapeDtypeStruct((1, Bp), jnp.float32),   # dist   (lane-dense row)
            jax.ShapeDtypeStruct((1, 1), jnp.float32),    # softplus-mean loss
        ),
        compiler_params=pltpu.CompilerParams(vmem_limit_bytes=32 * 1024 * 1024),
    )(xp, jnp.asarray(fc_weight_t, jnp.bfloat16), jnp.asarray(center, jnp.float32),
      lab_row)

    output_scores = scores[0, :B]
    if labels is None:
        return output_scores, None

    # TODO(synk): jnp.arccos has no Mosaic/Pallas lowering; this tiny (B,) elementwise
    # tail of the attack loss stays in plain JAX on the dist row.
    fmask = labels == 0
    dist_c = jnp.clip(dist[0, :B], -1.0 + 1e-7, 1.0 - 1e-7)
    angle = jnp.arccos(dist_c)
    t1 = jnp.maximum(0.5 - angle, 0.0)
    attack = t1 * t1
    n_fake = jnp.sum(fmask)
    attack_mean = jnp.sum(jnp.where(fmask, attack, 0.0)) / jnp.maximum(n_fake, 1)
    # TODO(synk): torch branches on sum(scores[labels==0]) != 0 (else loss_total is
    # undefined); we follow the defined path (fake samples present).
    loss_total = loss[0, 0] + attack_mean
    return output_scores, loss_total


if __name__ == "__main__":
    key = jax.random.PRNGKey(0)
    k1, k2, k3 = jax.random.split(key, 3)

    B = 8
    x = jax.random.normal(k1, (B, IN_DIM), jnp.float32)
    labels = jnp.array([1, 0, 1, 0, 0, 1, 0, 1], dtype=jnp.int32)

    # nn.Linear(160, 128, bias=False): weight (128, 160), uniform(-1/sqrt(in), 1/sqrt(in))
    bound_w = 1.0 / math.sqrt(IN_DIM)
    fc_weight = jax.random.uniform(k2, (FEAT_DIM, IN_DIM), jnp.float32,
                                   -bound_w, bound_w)
    # center: Parameter (1, 128) with xavier_uniform_ init
    bound_c = math.sqrt(6.0 / (1 + FEAT_DIM))
    center = jax.random.uniform(k3, (1, FEAT_DIM), jnp.float32,
                                -bound_c, bound_c)

    # Transpose + bf16 cast once, outside the per-step hot path.
    w_t = prepare_fc_weight(fc_weight)

    out_scores, loss_total = ppl_loss_forward(x, labels, w_t, center)
    jax.block_until_ready((out_scores, loss_total))
    print("KERNEL_OK")
</pallas_src>

<mosaic_0001>
module attributes {stable_mosaic.version = 11 : i64} {
  func.func @_ppl_kernel(%arg0: memref<128x160xbf16, #tpu.memory_space<vmem>>, %arg1: memref<160x128xbf16, #tpu.memory_space<vmem>>, %arg2: memref<1x128xf32, #tpu.memory_space<vmem>>, %arg3: memref<1x128xi32, #tpu.memory_space<vmem>>, %arg4: memref<1x128xf32, #tpu.memory_space<vmem>>, %arg5: memref<1x128xf32, #tpu.memory_space<vmem>>, %arg6: memref<1x1xf32, #tpu.memory_space<vmem>>) attributes {dimension_semantics = [], scalar_prefetch = 0 : i64, scratch_operands = 0 : i64, tpu.core_type = #tpu.core_type<tc>} {
    %c0 = arith.constant 0 : index
    %c0_0 = arith.constant 0 : index
    %0 = vector.load %arg0[%c0, %c0_0] : memref<128x160xbf16, #tpu.memory_space<vmem>>, vector<128x160xbf16>
    %c0_1 = arith.constant 0 : index
    %c0_2 = arith.constant 0 : index
    %1 = vector.load %arg1[%c0_1, %c0_2] : memref<160x128xbf16, #tpu.memory_space<vmem>>, vector<160x128xbf16>
    %c0_3 = arith.constant 0 : index
    %c0_4 = arith.constant 0 : index
    %2 = vector.load %arg2[%c0_3, %c0_4] : memref<1x128xf32, #tpu.memory_space<vmem>>, vector<1x128xf32>
    %c0_5 = arith.constant 0 : index
    %c0_6 = arith.constant 0 : index
    %3 = vector.load %arg3[%c0_5, %c0_6] : memref<1x128xi32, #tpu.memory_space<vmem>>, vector<1x128xi32>
    %cst = arith.constant dense<0.000000e+00> : vector<128x128xf32>
    %4 = tpu.matmul %0, %1, %cst {dimension_numbers = #tpu.dot_dimension_numbers<[1], [0], [0], [1], [0, 0, 1, 1], [], []>} : vector<128x160xbf16>, vector<160x128xbf16>, vector<128x128xf32> -> vector<128x128xf32>
    %cst_7 = arith.constant 1.000000e+00 : f32
    %5 = vector.broadcast %cst_7 : f32 to vector<1x128xf32>
    %6 = arith.mulf %4, %4 : vector<128x128xf32>
    %cst_8 = arith.constant dense<0.000000e+00> : vector<1x128xf32>
    %7 = tpu.matmul %5, %6, %cst_8 {dimension_numbers = #tpu.dot_dimension_numbers<[1], [1], [0], [0], [0, 0, 1, 0], [], []>} : vector<1x128xf32>, vector<128x128xf32>, vector<1x128xf32> -> vector<1x128xf32>
    %cst_9 = arith.constant 1.000000e-24 : f32
    %8 = vector.broadcast %cst_9 : f32 to vector<1x128xf32>
    %9 = arith.maximumf %7, %8 : vector<1x128xf32>
    %10 = math.rsqrt %9 : vector<1x128xf32>
    %11 = arith.mulf %2, %2 : vector<1x128xf32>
    %cst_10 = arith.constant dense<0.000000e+00> : vector<1xf32>
    %12 = vector.multi_reduction <add>, %11, %cst_10 [1] : vector<1x128xf32> to vector<1xf32>
    %13 = vector.shape_cast %12 : vector<1xf32> to vector<1x1xf32>
    %cst_11 = arith.constant 1.000000e-24 : f32
    %14 = vector.broadcast %cst_11 : f32 to vector<1x1xf32>
    %15 = arith.maximumf %13, %14 : vector<1x1xf32>
    %16 = math.rsqrt %15 : vector<1x1xf32>
    %17 = vector.broadcast %16 : vector<1x1xf32> to vector<1x128xf32>
    %18 = arith.mulf %2, %17 : vector<1x128xf32>
    %cst_12 = arith.constant dense<0.000000e+00> : vector<1x128xf32>
    %19 = tpu.matmul %18, %4, %cst_12 {dimension_numbers = #tpu.dot_dimension_numbers<[1], [1], [0], [0], [0, 0, 1, 0], [], []>} : vector<1x128xf32>, vector<128x128xf32>, vector<1x128xf32> -> vector<1x128xf32>
    %20 = arith.mulf %19, %10 : vector<1x128xf32>
    %c0_13 = arith.constant 0 : index
    %c0_14 = arith.constant 0 : index
    %21 = vector.load %arg4[%c0_13, %c0_14] : memref<1x128xf32, #tpu.memory_space<vmem>>, vector<1x128xf32>
    tpu.vector_store %arg4[%c0_13, %c0_14], %20 {strides = array<i32>} : memref<1x128xf32, #tpu.memory_space<vmem>>, vector<1x128xf32>,
    %c1_i32 = arith.constant 1 : i32
    %22 = vector.broadcast %c1_i32 : i32 to vector<1x128xi32>
    %23 = arith.cmpi eq, %3, %22 : vector<1x128xi32>
    %c0_i32 = arith.constant 0 : i32
    %24 = vector.broadcast %c0_i32 : i32 to vector<1x128xi32>
    %25 = arith.cmpi eq, %3, %24 : vector<1x128xi32>
    %26 = arith.ori %23, %25 : vector<1x128xi1>
    %cst_15 = arith.constant 5.000000e-01 : f32
    %27 = vector.broadcast %cst_15 : f32 to vector<1x128xf32>
    %28 = arith.subf %27, %20 : vector<1x128xf32>
    %cst_16 = arith.constant 2.000000e+01 : f32
    %29 = vector.broadcast %cst_16 : f32 to vector<1x128xf32>
    %30 = arith.mulf %29, %28 : vector<1x128xf32>
    %cst_17 = arith.constant 2.000000e-01 : f32
    %31 = vector.broadcast %cst_17 : f32 to vector<1x128xf32>
    %32 = arith.subf %20, %31 : vector<1x128xf32>
    %cst_18 = arith.constant 2.000000e+01 : f32
    %33 = vector.broadcast %cst_18 : f32 to vector<1x128xf32>
    %34 = arith.mulf %33, %32 : vector<1x128xf32>
    %35 = arith.select %25, %34, %20 : vector<1x128xi1>, vector<1x128xf32>
    %36 = arith.select %23, %30, %35 : vector<1x128xi1>, vector<1x128xf32>
    %37 = math.absf %36 : vector<1x128xf32>
    %cst_19 = arith.constant 0.000000e+00 : f32
    %38 = vector.broadcast %cst_19 : f32 to vector<1x128xf32>
    %39 = arith.subf %38, %37 : vector<1x128xf32>
    %40 = math.exp %39 : vector<1x128xf32>
    %cst_20 = arith.constant 9.99999974E-5 : f32
    %41 = vector.broadcast %cst_20 : f32 to vector<1x128xf32>
    %42 = arith.cmpf olt, %40, %41 : vector<1x128xf32>
    %cst_21 = arith.constant 5.000000e-01 : f32
    %43 = vector.broadcast %cst_21 : f32 to vector<1x128xf32>
    %44 = arith.mulf %43, %40 : vector<1x128xf32>
    %cst_22 = arith.constant 1.000000e+00 : f32
    %45 = vector.broadcast %cst_22 : f32 to vector<1x128xf32>
    %46 = arith.subf %45, %44 : vector<1x128xf32>
    %47 = arith.mulf %40, %46 : vector<1x128xf32>
    %cst_23 = arith.constant 1.000000e+00 : f32
    %48 = vector.broadcast %cst_23 : f32 to vector<1x128xf32>
    %49 = arith.addf %48, %40 : vector<1x128xf32>
    %50 = math.log %49 : vector<1x128xf32>
    %51 = arith.select %42, %47, %50 : vector<1x128xi1>, vector<1x128xf32>
    %cst_24 = arith.constant 2.000000e+01 : f32
    %52 = vector.broadcast %cst_24 : f32 to vector<1x128xf32>
    %53 = arith.cmpf ogt, %36, %52 : vector<1x128xf32>
    %cst_25 = arith.constant 0.000000e+00 : f32
    %54 = vector.broadcast %cst_25 : f32 to vector<1x128xf32>
    %55 = arith.maximumf %36, %54 : vector<1x128xf32>
    %56 = arith.addf %55, %51 : vector<1x128xf32>
    %57 = arith.select %53, %36, %56 : vector<1x128xi1>, vector<1x128xf32>
    %cst_26 = arith.constant 0.000000e+00 : f32
    %58 = vector.broadcast %cst_26 : f32 to vector<1x128xf32>
    %59 = arith.select %26, %57, %58 : vector<1x128xi1>, vector<1x128xf32>
    %cst_27 = arith.constant dense<0.000000e+00> : vector<1xf32>
    %60 = vector.multi_reduction <add>, %59, %cst_27 [1] : vector<1x128xf32> to vector<1xf32>
    %61 = vector.shape_cast %60 : vector<1xf32> to vector<1x1xf32>
    %cst_28 = arith.constant 1.250000e-01 : f32
    %62 = vector.broadcast %cst_28 : f32 to vector<1x1xf32>
    %63 = arith.mulf %61, %62 : vector<1x1xf32>
    %c0_29 = arith.constant 0 : index
    %c0_30 = arith.constant 0 : index
    %64 = vector.load %arg6[%c0_29, %c0_30] : memref<1x1xf32, #tpu.memory_space<vmem>>, vector<1x1xf32>
    tpu.vector_store %arg6[%c0_29, %c0_30], %63 {strides = array<i32>} : memref<1x1xf32, #tpu.memory_space<vmem>>, vector<1x1xf32>,
    %65 = arith.extui %25 : vector<1x128xi1> to vector<1x128xi32>
    %66 = arith.sitofp %65 : vector<1x128xi32> to vector<1x128xf32>
    %67 = arith.mulf %66, %10 : vector<1x128xf32>
    %cst_31 = arith.constant dense<0.000000e+00> : vector<1x128xf32>
    %68 = tpu.matmul %67, %4, %cst_31 {dimension_numbers = #tpu.dot_dimension_numbers<[1], [0], [0], [1], [0, 0, 1, 1], [], []>} : vector<1x128xf32>, vector<128x128xf32>, vector<1x128xf32> -> vector<1x128xf32>
    %69 = arith.mulf %68, %68 : vector<1x128xf32>
    %cst_32 = arith.constant dense<0.000000e+00> : vector<1xf32>
    %70 = vector.multi_reduction <add>, %69, %cst_32 [1] : vector<1x128xf32> to vector<1xf32>
    %71 = vector.shape_cast %70 : vector<1xf32> to vector<1x1xf32>
    %cst_33 = arith.constant 1.000000e-24 : f32
    %72 = vector.broadcast %cst_33 : f32 to vector<1x1xf32>
    %73 = arith.maximumf %71, %72 : vector<1x1xf32>
    %74 = math.rsqrt %73 : vector<1x1xf32>
    %75 = vector.broadcast %74 : vector<1x1xf32> to vector<1x128xf32>
    %76 = arith.mulf %68, %75 : vector<1x128xf32>
    %cst_34 = arith.constant dense<0.000000e+00> : vector<1x128xf32>
    %77 = tpu.matmul %76, %4, %cst_34 {dimension_numbers = #tpu.dot_dimension_numbers<[1], [1], [0], [0], [0, 0, 1, 0], [], []>} : vector<1x128xf32>, vector<128x128xf32>, vector<1x128xf32> -> vector<1x128xf32>
    %78 = arith.mulf %77, %10 : vector<1x128xf32>
    %c0_35 = arith.constant 0 : index
    %c0_36 = arith.constant 0 : index
    %79 = vector.load %arg5[%c0_35, %c0_36] : memref<1x128xf32, #tpu.memory_space<vmem>>, vector<1x128xf32>
    tpu.vector_store %arg5[%c0_35, %c0_36], %78 {strides = array<i32>} : memref<1x128xf32, #tpu.memory_space<vmem>>, vector<1x128xf32>,
    return
  }
}

</mosaic_0001>

<llo_original>
// kernel: tpu_custom_call.1
$region0: #{tpu_custom_call.1}
  #allocation0 [shape = 'u32[]', space=smem, size = 0x4, offset = 0x4, fixed_abs, tag = 'smem constant byte address 0x4 - core index']
  #allocation1 [shape = 'u32[144,128]{1,0:T(1,128)}', space=vmem, size = 0x12000, scoped, tag = 'internal scratch']
  %s0 = inlined_call_operand.vmem [shape: bf16[128,160], index: 0, kind: input, shape index: {}]
  %s1 = inlined_call_operand.vmem [shape: bf16[160,128], index: 1, kind: input, shape index: {}]
  %s2 = inlined_call_operand.vmem [shape: f32[1,128], index: 2, kind: input, shape index: {}]
  %s3 = inlined_call_operand.vmem [shape: s32[1,128], index: 3, kind: input, shape index: {}]
  %s4 = inlined_call_operand.hbm [shape: f32[1,128], index: 4, kind: output, shape index: {0}]
  %s5 = inlined_call_operand.hbm [shape: f32[1,128], index: 5, kind: output, shape index: {1}]
  %s6 = inlined_call_operand.hbm [shape: f32[1,1], index: 6, kind: output, shape index: {2}]
  %7 = xla_tuple %s4, %s5, %s6
  %s8 = sld [smem:[#allocation0]]
  $region42: #{tpu_custom_call.1} parent=0
    _
  %s10 = ssub.s32 1, %s8
  %s11 = scalar_select 0, %s10, %s8
  $region1: #{tpu_custom_call.1} parent=0
    #allocation2 [shape = 'u8[512]{0}', space=vmem, size = 0x400, scoped, tag = 'output window, operand 0, single buffered']
    #allocation3 [shape = 's32[1]{0}', space=sflag, size = 0x4, scoped, tag = 'scoped memory for tpu_custom_call.1']
    #allocation4 [shape = 'u8[512]{0}', space=vmem, size = 0x400, scoped, tag = 'output window, operand 1, single buffered']
    #allocation5 [shape = 's32[1]{0}', space=sflag, size = 0x4, scoped, tag = 'scoped memory for tpu_custom_call.1']
    #allocation6 [shape = 'u8[512]{0}', space=vmem, size = 0x400, scoped, tag = 'output window, operand 2, single buffered']
    %12 = vsyncpa [#allocation3], 0
    %13 = vsyncpa [#allocation5], 0
    // Predicated region
    $region2: #{tpu_custom_call.1} parent=1 // pred_check
      _
    $region3: #{tpu_custom_call.1} parent=1 // pred_check_branch
      %15 = sbr.rel (0) target = $region5
    $region4: #{tpu_custom_call.1} parent=1 // pred_region
      _
    $region5: #{tpu_custom_call.1} parent=1 // pred_fallthru
      _
    // Predicated region
    $region6: #{tpu_custom_call.1} parent=1 // pred_check
      _
    $region7: #{tpu_custom_call.1} parent=1 // pred_check_branch
      %17 = sbr.rel (0) target = $region9
    $region8: #{tpu_custom_call.1} parent=1 // pred_region
      _
    $region9: #{tpu_custom_call.1} parent=1 // pred_fallthru
      _
    // Predicated region
    $region10: #{tpu_custom_call.1} parent=1 // pred_check
      _
    $region11: #{tpu_custom_call.1} parent=1 // pred_check_branch
      %19 = sbr.rel (0) target = $region13
    $region12: #{tpu_custom_call.1} parent=1 // pred_region
      _
    $region13: #{tpu_custom_call.1} parent=1 // pred_fallthru
      _
    // Predicated region
    $region14: #{tpu_custom_call.1} parent=1 // pred_check
      _
    $region15: #{tpu_custom_call.1} parent=1 // pred_check_branch
      %21 = sbr.rel (0) target = $region17
    $region16: #{tpu_custom_call.1} parent=1 // pred_region
      _
    $region17: #{tpu_custom_call.1} parent=1 // pred_fallthru
      _
    %v23 = vld [vmem:[%s0] sm:$0xff]
    %v24 = vld [vmem:[%s0 + $0x8] sm:$0xff]
    %v25 = vld [vmem:[%s0 + $0x10] sm:$0xff]
    %v26 = vld [vmem:[%s0 + $0x18] sm:$0xff]
    %v27 = vld [vmem:[%s0 + $0x20] sm:$0xff]
    %v28 = vld [vmem:[%s0 + $0x28] sm:$0xff]
    %v29 = vld [vmem:[%s0 + $0x30] sm:$0xff]
    %v30 = vld [vmem:[%s0 + $0x38] sm:$0xff]
    %v31 = vld [vmem:[%s0 + $0x40] sm:$0xff]
    %v32 = vld [vmem:[%s0 + $0x48] sm:$0xff]
    %v33 = vld [vmem:[%s0 + $0x50] sm:$0xff]
    %v34 = vld [vmem:[%s0 + $0x58] sm:$0xff]
    %v35 = vld [vmem:[%s0 + $0x60] sm:$0xff]
    %v36 = vld [vmem:[%s0 + $0x68] sm:$0xff]
    %v37 = vld [vmem:[%s0 + $0x70] sm:$0xff]
    %v38 = vld [vmem:[%s0 + $0x78] sm:$0xff]
    %v39 = vld [vmem:[%s1] sm:$0xf]
    %v40 = vld [vmem:[%s1 + $0x4] sm:$0xf]
    %v41 = vld [vmem:[%s1 + $0x8] sm:$0xf]
    %v42 = vld [vmem:[%s1 + $0xc] sm:$0xf]
    %v43 = vld [vmem:[%s1 + $0x10] sm:$0xf]
    %v44 = vld [vmem:[%s1 + $0x14] sm:$0xf]
    %v45 = vld [vmem:[%s1 + $0x18] sm:$0xf]
    %v46 = vld [vmem:[%s1 + $0x1c] sm:$0xf]
    %v47 = vld [vmem:[%s1 + $0x20] sm:$0xf]
    %v48 = vld [vmem:[%s1 + $0x24] sm:$0xf]
    %v49 = vld [vmem:[%s1 + $0x28] sm:$0xf]
    %v50 = vld [vmem:[%s1 + $0x2c] sm:$0xf]
    %v51 = vld [vmem:[%s1 + $0x30] sm:$0xf]
    %v52 = vld [vmem:[%s1 + $0x34] sm:$0xf]
    %v53 = vld [vmem:[%s1 + $0x38] sm:$0xf]
    %v54 = vld [vmem:[%s1 + $0x3c] sm:$0xf]
    %v55 = vld [vmem:[%s1 + $0x40] sm:$0xf]
    %v56 = vld [vmem:[%s1 + $0x44] sm:$0xf]
    %v57 = vld [vmem:[%s1 + $0x48] sm:$0xf]
    %v58 = vld [vmem:[%s1 + $0x4c] sm:$0xf]
    %v59 = vld [vmem:[%s2] sm:$0x1]
    %v60 = vld [vmem:[%s3] sm:$0x1]
    %v77 = vunpack.c.l.b16 %v23
    %v78 = vunpack.c.h.b16 %v23
    %v79 = vunpack.c.l.b16 %v24
    %v80 = vunpack.c.h.b16 %v24
    %v81 = vunpack.c.l.b16 %v25
    %v82 = vunpack.c.h.b16 %v25
    %v83 = vunpack.c.l.b16 %v26
    %v84 = vunpack.c.h.b16 %v26
    %v85 = vunpack.c.l.b16 %v27
    %v86 = vunpack.c.h.b16 %v27
    %v87 = vunpack.c.l.b16 %v28
    %v88 = vunpack.c.h.b16 %v28
    %v89 = vunpack.c.l.b16 %v29
    %v90 = vunpack.c.h.b16 %v29
    %v91 = vunpack.c.l.b16 %v30
    %v92 = vunpack.c.h.b16 %v30
    %v93 = vunpack.c.l.b16 %v31
    %v94 = vunpack.c.h.b16 %v31
    %v95 = vunpack.c.l.b16 %v32
    %v96 = vunpack.c.h.b16 %v32
    %v97 = vunpack.c.l.b16 %v33
    %v98 = vunpack.c.h.b16 %v33
    %v99 = vunpack.c.l.b16 %v34
    %v100 = vunpack.c.h.b16 %v34
    %v101 = vunpack.c.l.b16 %v35
    %v102 = vunpack.c.h.b16 %v35
    %v103 = vunpack.c.l.b16 %v36
    %v104 = vunpack.c.h.b16 %v36
    %v105 = vunpack.c.l.b16 %v37
    %v106 = vunpack.c.h.b16 %v37
    %v107 = vunpack.c.l.b16 %v38
    %v108 = vunpack.c.h.b16 %v38
    %v109 = vpack.c.b16 %v79, %v77
    %v110 = vpack.c.b16 %v80, %v78
    %v111 = vpack.c.b16 %v83, %v81
    %v112 = vpack.c.b16 %v84, %v82
    %v113 = vpack.c.b16 %v87, %v85
    %v114 = vpack.c.b16 %v88, %v86
    %v115 = vpack.c.b16 %v91, %v89
    %v116 = vpack.c.b16 %v92, %v90
    %v117 = vpack.c.b16 %v95, %v93
    %v118 = vpack.c.b16 %v96, %v94
    %v119 = vpack.c.b16 %v99, %v97
    %v120 = vpack.c.b16 %v100, %v98
    %v121 = vpack.c.b16 %v103, %v101
    %v122 = vpack.c.b16 %v104, %v102
    %v123 = vpack.c.b16 %v107, %v105
    %v124 = vpack.c.b16 %v108, %v106
    %v153 = vunpack.c.l.b16 %v39
    %v154 = vunpack.c.l.b16 %v40
    %v155 = vunpack.c.l.b16 %v41
    %v156 = vunpack.c.l.b16 %v42
    %v157 = vunpack.c.l.b16 %v43
    %v158 = vunpack.c.l.b16 %v44
    %v159 = vunpack.c.l.b16 %v45
    %v160 = vunpack.c.l.b16 %v46
    %v161 = vunpack.c.l.b16 %v47
    %v162 = vunpack.c.l.b16 %v48
    %v163 = vunpack.c.l.b16 %v49
    %v164 = vunpack.c.l.b16 %v50
    %v165 = vunpack.c.l.b16 %v51
    %v166 = vunpack.c.l.b16 %v52
    %v167 = vunpack.c.l.b16 %v53
    %v168 = vunpack.c.l.b16 %v54
    %v169 = vunpack.c.l.b16 %v55
    %v170 = vunpack.c.l.b16 %v56
    %v171 = vunpack.c.l.b16 %v57
    %v172 = vunpack.c.l.b16 %v58
    %v173 = vpack.c.b16 %v154, %v153
    %v174 = vpack.c.b16 %v156, %v155
    %v175 = vpack.c.b16 %v158, %v157
    %v176 = vpack.c.b16 %v160, %v159
    %v177 = vpack.c.b16 %v162, %v161
    %v178 = vpack.c.b16 %v164, %v163
    %v179 = vpack.c.b16 %v166, %v165
    %v180 = vpack.c.b16 %v168, %v167
    %v181 = vpack.c.b16 %v170, %v169
    %v182 = vpack.c.b16 %v172, %v171
    %vm193 = vcmask 261120
    %v195 = vsel %vm193, %v110, 0
    %v198 = vsel %vm193, %v112, 0
    %v201 = vsel %vm193, %v114, 0
    %v204 = vsel %vm193, %v116, 0
    %v207 = vsel %vm193, %v118, 0
    %v210 = vsel %vm193, %v120, 0
    %v213 = vsel %vm193, %v122, 0
    %v216 = vsel %vm193, %v124, 0
    %218 = vmatprep.subr.bf16.mxu0 0
    %219 = vmatpush1.bf16.msra.mxu0 %v173
    %220 = vmatprep.subr.bf16.mxu0 0
    %221 = vmatpush1.bf16.msra.mxu0 %v174
    %222 = vmatprep.subr.bf16.mxu0 0
    %223 = vmatpush1.bf16.msra.mxu0 %v175
    %224 = vmatprep.subr.bf16.mxu0 0
    %225 = vmatpush1.bf16.msra.mxu0 %v176
    %226 = vmatprep.subr.bf16.mxu0 0
    %227 = vmatpush1.bf16.msra.mxu0 %v177
    %228 = vmatprep.subr.bf16.mxu0 0
    %229 = vmatpush1.bf16.msra.mxu0 %v178
    %230 = vmatprep.subr.bf16.mxu0 0
    %231 = vmatpush1.bf16.msra.mxu0 %v179
    %232 = vmatprep.subr.bf16.mxu0 0
    %233 = vmatpush1.bf16.msra.mxu0 %v180
    %234 = vmatprep.subr.bf16.mxu0 0
    %235 = vmatpush1.bf16.msra.mxu0 %v181
    %236 = vmatprep.subr.bf16.mxu0 0
    %237 = vmatpush1.bf16.msra.mxu0 %v182
    %238 = vmatprep.subr.bf16.mxu0 0
    %239 = vmatpush1.bf16.msra.mxu0 0
    %240 = vmatprep.subr.bf16.mxu0 0
    %241 = vmatpush1.bf16.msra.mxu0 0
    %242 = vmatprep.subr.bf16.mxu0 0
    %243 = vmatpush1.bf16.msra.mxu0 0
    %244 = vmatprep.subr.bf16.mxu0 0
    %245 = vmatpush1.bf16.msra.mxu0 0
    %246 = vmatprep.subr.bf16.mxu0 0
    %247 = vmatpush1.bf16.msra.mxu0 0
    %248 = vmatprep.subr.bf16.mxu0 0
    %249 = vmatpush1.bf16.msra.mxu0 0
    %250 = vmatprep.mubr.bf16.mxu0 %v195
    %251 = vmatmul.mubr.bf16.gmra.mrb[0].mxu0 %v109
    %v252 = vpop.f32.mrb[0].mxu0
    %v253 = vadd.f32 0.0, %v252
    %v254 = vpop.f32.mrb[0].mxu0
    %v255 = vpop.f32.mrb[0].mxu0
    %v256 = vadd.f32 0.0, %v255
    %v257 = vpop.f32.mrb[0].mxu0
    %258 = vmatprep.mubr.bf16.mxu0 %v198
    %259 = vmatmul.mubr.bf16.gmra.mrb[0].mxu0 %v111
    %v260 = vpop.f32.mrb[0].mxu0
    %v261 = vadd.f32 0.0, %v260
    %v262 = vpop.f32.mrb[0].mxu0
    %v263 = vpop.f32.mrb[0].mxu0
    %v264 = vadd.f32 0.0, %v263
    %v265 = vpop.f32.mrb[0].mxu0
    %266 = vmatprep.mubr.bf16.mxu0 %v201
    %267 = vmatmul.mubr.bf16.gmra.mrb[0].mxu0 %v113
    %v268 = vpop.f32.mrb[0].mxu0
    %v269 = vadd.f32 0.0, %v268
    %v270 = vpop.f32.mrb[0].mxu0
    %v271 = vpop.f32.mrb[0].mxu0
    %v272 = vadd.f32 0.0, %v271
    %v273 = vpop.f32.mrb[0].mxu0
    %274 = vmatprep.mubr.bf16.mxu0 %v204
    %275 = vmatmul.mubr.bf16.gmra.mrb[0].mxu0 %v115
    %v276 = vpop.f32.mrb[0].mxu0
    %v277 = vadd.f32 0.0, %v276
    %v278 = vpop.f32.mrb[0].mxu0
    %v279 = vpop.f32.mrb[0].mxu0
    %v280 = vadd.f32 0.0, %v279
    %v281 = vpop.f32.mrb[0].mxu0
    %282 = vmatprep.mubr.bf16.mxu0 %v207
    %283 = vmatmul.mubr.bf16.gmra.mrb[0].mxu0 %v117
    %v284 = vpop.f32.mrb[0].mxu0
    %v285 = vadd.f32 0.0, %v284
    %v286 = vpop.f32.mrb[0].mxu0
    %v287 = vpop.f32.mrb[0].mxu0
    %v288 = vadd.f32 0.0, %v287
    %v289 = vpop.f32.mrb[0].mxu0
    %290 = vmatprep.mubr.bf16.mxu0 %v210
    %291 = vmatmul.mubr.bf16.gmra.mrb[0].mxu0 %v119
    %v292 = vpop.f32.mrb[0].mxu0
    %v293 = vadd.f32 0.0, %v292
    %v294 = vpop.f32.mrb[0].mxu0
    %v295 = vpop.f32.mrb[0].mxu0
    %v296 = vadd.f32 0.0, %v295
    %v297 = vpop.f32.mrb[0].mxu0
    %298 = vmatprep.mubr.bf16.mxu0 %v213
    %299 = vmatmul.mubr.bf16.gmra.mrb[0].mxu0 %v121
    %v300 = vpop.f32.mrb[0].mxu0
    %v301 = vadd.f32 0.0, %v300
    %v302 = vpop.f32.mrb[0].mxu0
    %v303 = vpop.f32.mrb[0].mxu0
    %v304 = vadd.f32 0.0, %v303
    %v305 = vpop.f32.mrb[0].mxu0
    %306 = vmatprep.mubr.bf16.mxu0 %v216
    %307 = vmatmul.mubr.bf16.gmra.mrb[0].mxu0 %v123
    %v308 = vpop.f32.mrb[0].mxu0
    %v309 = vadd.f32 0.0, %v308
    %v310 = vpop.f32.mrb[0].mxu0
    %v311 = vpop.f32.mrb[0].mxu0
    %v312 = vadd.f32 0.0, %v311
    %v313 = vpop.f32.mrb[0].mxu0
    %314 = vdwg.mxu0
    %v315 = vmul.f32 %v253, %v253
    %v316 = vmul.f32 %v256, %v256
    %v317 = vmul.f32 %v261, %v261
    %v318 = vmul.f32 %v264, %v264
    %v319 = vmul.f32 %v269, %v269
    %v320 = vmul.f32 %v272, %v272
    %v321 = vmul.f32 %v277, %v277
    %v322 = vmul.f32 %v280, %v280
    %v323 = vmul.f32 %v285, %v285
    %v324 = vmul.f32 %v288, %v288
    %v325 = vmul.f32 %v293, %v293
    %v326 = vmul.f32 %v296, %v296
    %v327 = vmul.f32 %v301, %v301
    %v328 = vmul.f32 %v304, %v304
    %v329 = vmul.f32 %v309, %v309
    %v330 = vmul.f32 %v312, %v312
    %331 = vmatprep.subr.mxu0 0.0
    %332 = vmatpush1.xpose.msra.mxu0 %v315
    %333 = vmatprep.subr.mxu0 0.0
    %334 = vmatpush1.xpose.msra.mxu0 %v316
    %335 = vmatprep.subr.mxu0 0.0
    %336 = vmatpush1.xpose.msra.mxu0 %v317
    %337 = vmatprep.subr.mxu0 0.0
    %338 = vmatpush1.xpose.msra.mxu0 %v318
    %339 = vmatprep.subr.mxu0 0.0
    %340 = vmatpush1.xpose.msra.mxu0 %v319
    %341 = vmatprep.subr.mxu0 0.0
    %342 = vmatpush1.xpose.msra.mxu0 %v320
    %343 = vmatprep.subr.mxu0 0.0
    %344 = vmatpush1.xpose.msra.mxu0 %v321
    %345 = vmatprep.subr.mxu0 0.0
    %346 = vmatpush1.xpose.msra.mxu0 %v322
    %347 = vmatprep.subr.mxu0 0.0
    %348 = vmatpush1.xpose.msra.mxu0 %v323
    %349 = vmatprep.subr.mxu0 0.0
    %350 = vmatpush1.xpose.msra.mxu0 %v324
    %351 = vmatprep.subr.mxu0 0.0
    %352 = vmatpush1.xpose.msra.mxu0 %v325
    %353 = vmatprep.subr.mxu0 0.0
    %354 = vmatpush1.xpose.msra.mxu0 %v326
    %355 = vmatprep.subr.mxu0 0.0
    %356 = vmatpush1.xpose.msra.mxu0 %v327
    %357 = vmatprep.subr.mxu0 0.0
    %358 = vmatpush1.xpose.msra.mxu0 %v328
    %359 = vmatprep.subr.mxu0 0.0
    %360 = vmatpush1.xpose.msra.mxu0 %v329
    %361 = vmatprep.subr.mxu0 0.0
    %362 = vmatpush1.xpose.msra.mxu0 %v330
    %363 = vmatprep.subr.mxu0 0.0
    %364 = vmatpush1.xpose.msra.mxu0 0.0
    %365 = vmatprep.subr.mxu0 0.0
    %366 = vmatpush1.xpose.msra.mxu0 0.0
    %367 = vmatprep.subr.mxu0 0.0
    %368 = vmatpush1.xpose.msra.mxu0 0.0
    %369 = vmatprep.subr.mxu0 0.0
    %370 = vmatpush1.xpose.msra.mxu0 0.0
    %371 = vmatprep.subr.mxu0 0.0
    %372 = vmatpush1.xpose.msra.mxu0 0.0
    %373 = vmatprep.subr.mxu0 0.0
    %374 = vmatpush1.xpose.msra.mxu0 0.0
    %375 = vmatprep.subr.mxu0 0.0
    %376 = vmatpush1.xpose.msra.mxu0 0.0
    %377 = vmatprep.subr.mxu0 0.0
    %378 = vmatpush1.xpose.msra.mxu0 0.0
    %379 = vmatprep.subr.mxu0 0.0
    %380 = vmatpush1.xpose.msra.mxu0 0.0
    %381 = vmatprep.subr.mxu0 0.0
    %382 = vmatpush1.xpose.msra.mxu0 0.0
    %383 = vmatprep.subr.mxu0 0.0
    %384 = vmatpush1.xpose.msra.mxu0 0.0
    %385 = vmatprep.subr.mxu0 0.0
    %386 = vmatpush1.xpose.msra.mxu0 0.0
    %387 = vmatprep.subr.mxu0 0.0
    %388 = vmatpush1.xpose.msra.mxu0 0.0
    %389 = vmatprep.subr.mxu0 0.0
    %390 = vmatpush1.xpose.msra.mxu0 0.0
    %391 = vmatprep.subr.mxu0 0.0
    %392 = vmatpush1.xpose.msra.mxu0 0.0
    %393 = vmatprep.subr.mxu0 0.0
    %394 = vmatpush1.xpose.msra.mxu0 0.0
    %395 = vmatprep.mubr.f32.mxu0 0.0
    %396 = vmatmul.mubr.f32.gmra.mrb[0].mxu0 1.0
    %v397 = vpop.f32.mrb[0].mxu0
    %v398 = vadd.f32 0.0, %v397
    %v399 = vpop.f32.mrb[0].mxu0
    %400 = vdwg.mxu0
    %v401 = vmax.f32 %v398, 1e-24
    %v402 = vrsqrt.pop %v401
    %v403 = vmul.f32 %v59, %v59
    %vm404 = vcmask 1040384
    %v405 = vsel %vm404, %v403, 0.0
    %406 = vadd.xlane.f32.xlu0 %v405
    %v407 = vpop.xlane.xlu0 %406
    %v408 = vmax.f32 %v407, 1e-24
    %v409 = vrsqrt.pop %v408
    %v410 = vmul.f32 %v59, %v409
    %411 = vmatprep.subr.mxu0 0.0
    %412 = vmatpush1.xpose.msra.mxu0 %v253
    %413 = vmatprep.subr.mxu0 0.0
    %414 = vmatpush1.xpose.msra.mxu0 %v256
    %415 = vmatprep.subr.mxu0 0.0
    %416 = vmatpush1.xpose.msra.mxu0 %v261
    %417 = vmatprep.subr.mxu0 0.0
    %418 = vmatpush1.xpose.msra.mxu0 %v264
    %419 = vmatprep.subr.mxu0 0.0
    %420 = vmatpush1.xpose.msra.mxu0 %v269
    %421 = vmatprep.subr.mxu0 0.0
    %422 = vmatpush1.xpose.msra.mxu0 %v272
    %423 = vmatprep.subr.mxu0 0.0
    %424 = vmatpush1.xpose.msra.mxu0 %v277
    %425 = vmatprep.subr.mxu0 0.0
    %426 = vmatpush1.xpose.msra.mxu0 %v280
    %427 = vmatprep.subr.mxu0 0.0
    %428 = vmatpush1.xpose.msra.mxu0 %v285
    %429 = vmatprep.subr.mxu0 0.0
    %430 = vmatpush1.xpose.msra.mxu0 %v288
    %431 = vmatprep.subr.mxu0 0.0
    %432 = vmatpush1.xpose.msra.mxu0 %v293
    %433 = vmatprep.subr.mxu0 0.0
    %434 = vmatpush1.xpose.msra.mxu0 %v296
    %435 = vmatprep.subr.mxu0 0.0
    %436 = vmatpush1.xpose.msra.mxu0 %v301
    %437 = vmatprep.subr.mxu0 0.0
    %438 = vmatpush1.xpose.msra.mxu0 %v304
    %439 = vmatprep.subr.mxu0 0.0
    %440 = vmatpush1.xpose.msra.mxu0 %v309
    %441 = vmatprep.subr.mxu0 0.0
    %442 = vmatpush1.xpose.msra.mxu0 %v312
    %443 = vmatprep.subr.mxu0 0.0
    %444 = vmatpush1.xpose.msra.mxu0 0.0
    %445 = vmatprep.subr.mxu0 0.0
    %446 = vmatpush1.xpose.msra.mxu0 0.0
    %447 = vmatprep.subr.mxu0 0.0
    %448 = vmatpush1.xpose.msra.mxu0 0.0
    %449 = vmatprep.subr.mxu0 0.0
    %450 = vmatpush1.xpose.msra.mxu0 0.0
    %451 = vmatprep.subr.mxu0 0.0
    %452 = vmatpush1.xpose.msra.mxu0 0.0
    %453 = vmatprep.subr.mxu0 0.0
    %454 = vmatpush1.xpose.msra.mxu0 0.0
    %455 = vmatprep.subr.mxu0 0.0
    %456 = vmatpush1.xpose.msra.mxu0 0.0
    %457 = vmatprep.subr.mxu0 0.0
    %458 = vmatpush1.xpose.msra.mxu0 0.0
    %459 = vmatprep.subr.mxu0 0.0
    %460 = vmatpush1.xpose.msra.mxu0 0.0
    %461 = vmatprep.subr.mxu0 0.0
    %462 = vmatpush1.xpose.msra.mxu0 0.0
    %463 = vmatprep.subr.mxu0 0.0
    %464 = vmatpush1.xpose.msra.mxu0 0.0
    %465 = vmatprep.subr.mxu0 0.0
    %466 = vmatpush1.xpose.msra.mxu0 0.0
    %467 = vmatprep.subr.mxu0 0.0
    %468 = vmatpush1.xpose.msra.mxu0 0.0
    %469 = vmatprep.subr.mxu0 0.0
    %470 = vmatpush1.xpose.msra.mxu0 0.0
    %471 = vmatprep.subr.mxu0 0.0
    %472 = vmatpush1.xpose.msra.mxu0 0.0
    %473 = vmatprep.subr.mxu0 0.0
    %474 = vmatpush1.xpose.msra.mxu0 0.0
    %475 = vmatprep.mubr.f32.mxu0 0.0
    %476 = vmatmul.mubr.f32.gmra.mrb[0].mxu0 %v410
    %v477 = vpop.f32.mrb[0].mxu0
    %v478 = vadd.f32 0.0, %v477
    %v479 = vpop.f32.mrb[0].mxu0
    %480 = vdwg.mxu0
    %v481 = vmul.f32 %v478, %v402
    %482 = vst [vmem:[#allocation2] sm:$0x1] %v481
    %vm483 = vcmp.eq.s32.totalorder %v60, 1
    %vm484 = vcmp.eq.s32.totalorder %v60, 0
    %vm485 = vmor %vm483, %vm484
    %v486 = vsub.f32 0.5, %v481
    %v487 = vmul.f32 %v486, 20.0
    %v488 = vsub.f32 %v481, 0.2
    %v489 = vmul.f32 %v488, 20.0
    %v490 = vsel %vm484, %v489, %v481
    %v491 = vsel %vm483, %v487, %v490
    %v492 = vand.u32 2147483647, %v491
    %v493 = vsub.f32 0.0, %v492
    %v494 = vmul.f32 %v493, 1.442695
    %v495 = vpow.pop %v494
    %vm496 = vcmp.lt.f32.partialorder %v495, 0.0001
    %v497 = vmul.f32 %v495, 0.5
    %v498 = vsub.f32 1.0, %v497
    %v499 = vmul.f32 %v495, %v498
    %v500 = vadd.f32 %v495, 1.0
    %v501 = vlog2.pop %v500
    %v502 = vmul.f32 %v501, 0.6931472
    %v503 = vsel %vm496, %v499, %v502
    %vm504 = vcmp.gt.f32.partialorder %v491, 20.0
    %v505 = vmax.f32 %v491, 0.0
    %v506 = vadd.f32 %v505, %v503
    %v507 = vsel %vm504, %v491, %v506
    %v508 = vsel %vm485, %v507, 0.0
    %v509 = vsel %vm404, %v508, 0.0
    %510 = vadd.xlane.f32.xlu0 %v509
    %v511 = vpop.xlane.xlu0 %510
    %v512 = vmul.f32 %v511, 0.125
    %vm513 = vcmask 0
    %514 = vst.msk [vmem:[#allocation6] sm:$0x1] %vm513, %v512
    %v515 = vsel %vm484, 1, 0
    %v516 = vcvt.s32.f32 %v515
    %v517 = vmul.f32 %v516, %v402
    %518 = vmatprep.subr.mxu0 0.0
    %519 = vmatpush1.msra.mxu0 %v253
    %520 = vmatprep.subr.mxu0 0.0
    %521 = vmatpush1.msra.mxu0 %v256
    %522 = vmatprep.subr.mxu0 0.0
    %523 = vmatpush1.msra.mxu0 %v261
    %524 = vmatprep.subr.mxu0 0.0
    %525 = vmatpush1.msra.mxu0 %v264
    %526 = vmatprep.subr.mxu0 0.0
    %527 = vmatpush1.msra.mxu0 %v269
    %528 = vmatprep.subr.mxu0 0.0
    %529 = vmatpush1.msra.mxu0 %v272
    %530 = vmatprep.subr.mxu0 0.0
    %531 = vmatpush1.msra.mxu0 %v277
    %532 = vmatprep.subr.mxu0 0.0
    %533 = vmatpush1.msra.mxu0 %v280
    %534 = vmatprep.subr.mxu0 0.0
    %535 = vmatpush1.msra.mxu0 %v285
    %536 = vmatprep.subr.mxu0 0.0
    %537 = vmatpush1.msra.mxu0 %v288
    %538 = vmatprep.subr.mxu0 0.0
    %539 = vmatpush1.msra.mxu0 %v293
    %540 = vmatprep.subr.mxu0 0.0
    %541 = vmatpush1.msra.mxu0 %v296
    %542 = vmatprep.subr.mxu0 0.0
    %543 = vmatpush1.msra.mxu0 %v301
    %544 = vmatprep.subr.mxu0 0.0
    %545 = vmatpush1.msra.mxu0 %v304
    %546 = vmatprep.subr.mxu0 0.0
    %547 = vmatpush1.msra.mxu0 %v309
    %548 = vmatprep.subr.mxu0 0.0
    %549 = vmatpush1.msra.mxu0 %v312
    %550 = vmatprep.subr.mxu0 0.0
    %551 = vmatpush1.msra.mxu0 0.0
    %552 = vmatprep.subr.mxu0 0.0
    %553 = vmatpush1.msra.mxu0 0.0
    %554 = vmatprep.subr.mxu0 0.0
    %555 = vmatpush1.msra.mxu0 0.0
    %556 = vmatprep.subr.mxu0 0.0
    %557 = vmatpush1.msra.mxu0 0.0
    %558 = vmatprep.subr.mxu0 0.0
    %559 = vmatpush1.msra.mxu0 0.0
    %560 = vmatprep.subr.mxu0 0.0
    %561 = vmatpush1.msra.mxu0 0.0
    %562 = vmatprep.subr.mxu0 0.0
    %563 = vmatpush1.msra.mxu0 0.0
    %564 = vmatprep.subr.mxu0 0.0
    %565 = vmatpush1.msra.mxu0 0.0
    %566 = vmatprep.subr.mxu0 0.0
    %567 = vmatpush1.msra.mxu0 0.0
    %568 = vmatprep.subr.mxu0 0.0
    %569 = vmatpush1.msra.mxu0 0.0
    %570 = vmatprep.subr.mxu0 0.0
    %571 = vmatpush1.msra.mxu0 0.0
    %572 = vmatprep.subr.mxu0 0.0
    %573 = vmatpush1.msra.mxu0 0.0
    %574 = vmatprep.subr.mxu0 0.0
    %575 = vmatpush1.msra.mxu0 0.0
    %576 = vmatprep.subr.mxu0 0.0
    %577 = vmatpush1.msra.mxu0 0.0
    %578 = vmatprep.subr.mxu0 0.0
    %579 = vmatpush1.msra.mxu0 0.0
    %580 = vmatprep.subr.mxu0 0.0
    %581 = vmatpush1.msra.mxu0 0.0
    %582 = vmatprep.mubr.f32.mxu0 0.0
    %583 = vmatmul.mubr.f32.gmra.mrb[0].mxu0 %v517
    %v584 = vpop.f32.mrb[0].mxu0
    %v585 = vadd.f32 0.0, %v584
    %v586 = vpop.f32.mrb[0].mxu0
    %587 = vdwg.mxu0
    %v588 = vmul.f32 %v585, %v585
    %v589 = vsel %vm404, %v588, 0.0
    %590 = vadd.xlane.f32.xlu0 %v589
    %v591 = vpop.xlane.xlu0 %590
    %v592 = vmax.f32 %v591, 1e-24
    %v593 = vrsqrt.pop %v592
    %v594 = vmul.f32 %v585, %v593
    %595 = vmatprep.subr.mxu0 0.0
    %596 = vmatpush1.xpose.msra.mxu0 %v253
    %597 = vmatprep.subr.mxu0 0.0
    %598 = vmatpush1.xpose.msra.mxu0 %v256
    %599 = vmatprep.subr.mxu0 0.0
    %600 = vmatpush1.xpose.msra.mxu0 %v261
    %601 = vmatprep.subr.mxu0 0.0
    %602 = vmatpush1.xpose.msra.mxu0 %v264
    %603 = vmatprep.subr.mxu0 0.0
    %604 = vmatpush1.xpose.msra.mxu0 %v269
    %605 = vmatprep.subr.mxu0 0.0
    %606 = vmatpush1.xpose.msra.mxu0 %v272
    %607 = vmatprep.subr.mxu0 0.0
    %608 = vmatpush1.xpose.msra.mxu0 %v277
    %609 = vmatprep.subr.mxu0 0.0
    %610 = vmatpush1.xpose.msra.mxu0 %v280
    %611 = vmatprep.subr.mxu0 0.0
    %612 = vmatpush1.xpose.msra.mxu0 %v285
    %613 = vmatprep.subr.mxu0 0.0
    %614 = vmatpush1.xpose.msra.mxu0 %v288
    %615 = vmatprep.subr.mxu0 0.0
    %616 = vmatpush1.xpose.msra.mxu0 %v293
    %617 = vmatprep.subr.mxu0 0.0
    %618 = vmatpush1.xpose.msra.mxu0 %v296
    %619 = vmatprep.subr.mxu0 0.0
    %620 = vmatpush1.xpose.msra.mxu0 %v301
    %621 = vmatprep.subr.mxu0 0.0
    %622 = vmatpush1.xpose.msra.mxu0 %v304
    %623 = vmatprep.subr.mxu0 0.0
    %624 = vmatpush1.xpose.msra.mxu0 %v309
    %625 = vmatprep.subr.mxu0 0.0
    %626 = vmatpush1.xpose.msra.mxu0 %v312
    %627 = vmatprep.subr.mxu0 0.0
    %628 = vmatpush1.xpose.msra.mxu0 0.0
    %629 = vmatprep.subr.mxu0 0.0
    %630 = vmatpush1.xpose.msra.mxu0 0.0
    %631 = vmatprep.subr.mxu0 0.0
    %632 = vmatpush1.xpose.msra.mxu0 0.0
    %633 = vmatprep.subr.mxu0 0.0
    %634 = vmatpush1.xpose.msra.mxu0 0.0
    %635 = vmatprep.subr.mxu0 0.0
    %636 = vmatpush1.xpose.msra.mxu0 0.0
    %637 = vmatprep.subr.mxu0 0.0
    %638 = vmatpush1.xpose.msra.mxu0 0.0
    %639 = vmatprep.subr.mxu0 0.0
    %640 = vmatpush1.xpose.msra.mxu0 0.0
    %641 = vmatprep.subr.mxu0 0.0
    %642 = vmatpush1.xpose.msra.mxu0 0.0
    %643 = vmatprep.subr.mxu0 0.0
    %644 = vmatpush1.xpose.msra.mxu0 0.0
    %645 = vmatprep.subr.mxu0 0.0
    %646 = vmatpush1.xpose.msra.mxu0 0.0
    %647 = vmatprep.subr.mxu0 0.0
    %648 = vmatpush1.xpose.msra.mxu0 0.0
    %649 = vmatprep.subr.mxu0 0.0
    %650 = vmatpush1.xpose.msra.mxu0 0.0
    %651 = vmatprep.subr.mxu0 0.0
    %652 = vmatpush1.xpose.msra.mxu0 0.0
    %653 = vmatprep.subr.mxu0 0.0
    %654 = vmatpush1.xpose.msra.mxu0 0.0
    %655 = vmatprep.subr.mxu0 0.0
    %656 = vmatpush1.xpose.msra.mxu0 0.0
    %657 = vmatprep.subr.mxu0 0.0
    %658 = vmatpush1.xpose.msra.mxu0 0.0
    %659 = vmatprep.mubr.f32.mxu0 0.0
    %660 = vmatmul.mubr.f32.gmra.mrb[0].mxu0 %v594
    %v661 = vpop.f32.mrb[0].mxu0
    %v662 = vadd.f32 0.0, %v661
    %v663 = vpop.f32.mrb[0].mxu0
    %664 = vdwg.mxu0
    %v665 = vmul.f32 %v662, %v402
    %666 = vst [vmem:[#allocation4] sm:$0x1] %v665
    // Predicated region
    $region18: #{tpu_custom_call.1} parent=1 // pred_check
      _
    $region19: #{tpu_custom_call.1} parent=1 // pred_check_branch
      %668 = sbr.rel (0) target = $region21
    $region20: #{tpu_custom_call.1} parent=1 // pred_region
      %s670 = ssub.s32 16, 16
      %671 = vsyncadd [#allocation3], %s670
      %s673 = sshll.u32 [#allocation2], 4
      %s674 = int_to_ptr.vmem [resolvable:$true] %s673
      %676 = dma.vmem_to_hbm [thread:$0]  %s674, 16, %s4, [#allocation3]
    $region21: #{tpu_custom_call.1} parent=1 // pred_fallthru
      _
    // Predicated region
    $region22: #{tpu_custom_call.1} parent=1 // pred_check
      _
    $region23: #{tpu_custom_call.1} parent=1 // pred_check_branch
      %678 = sbr.rel (0) target = $region25
    $region24: #{tpu_custom_call.1} parent=1 // pred_region
      %s680 = ssub.s32 16, 16
      %681 = vsyncadd [#allocation5], %s680
      %s683 = sshll.u32 [#allocation4], 4
      %s684 = int_to_ptr.vmem [resolvable:$true] %s683
      %686 = dma.vmem_to_hbm [thread:$0]  %s684, 16, %s5, [#allocation5]
    $region25: #{tpu_custom_call.1} parent=1 // pred_fallthru
      _
    // Predicated region
    $region26: #{tpu_custom_call.1} parent=1 // pred_check
      _
    $region27: #{tpu_custom_call.1} parent=1 // pred_check_branch
      %688 = sbr.rel (0) target = $region29
    $region28: #{tpu_custom_call.1} parent=1 // pred_region
      %s690 = ssub.s32 16, 16
      %691 = vsyncadd [#allocation5], %s690
      %s693 = sshll.u32 [#allocation6], 4
      %s694 = int_to_ptr.vmem [resolvable:$true] %s693
      %696 = dma.vmem_to_hbm [thread:$0]  %s694, 16, %s6, [#allocation5]
    $region29: #{tpu_custom_call.1} parent=1 // pred_fallthru
      _
    // Predicated region
    $region30: #{tpu_custom_call.1} parent=1 // pred_check
      _
    $region31: #{tpu_custom_call.1} parent=1 // pred_check_branch
      %698 = sbr.rel (0) target = $region33
    $region32: #{tpu_custom_call.1} parent=1 // pred_region
      %699 = dma.done [#allocation3], 16
    $region33: #{tpu_custom_call.1} parent=1 // pred_fallthru
      _
    // Predicated region
    $region34: #{tpu_custom_call.1} parent=1 // pred_check
      _
    $region35: #{tpu_custom_call.1} parent=1 // pred_check_branch
      %701 = sbr.rel (0) target = $region37
    $region36: #{tpu_custom_call.1} parent=1 // pred_region
      %702 = dma.done [#allocation5], 16
    $region37: #{tpu_custom_call.1} parent=1 // pred_fallthru
      _
    // Predicated region
    $region38: #{tpu_custom_call.1} parent=1 // pred_check
      _
    $region39: #{tpu_custom_call.1} parent=1 // pred_check_branch
      %704 = sbr.rel (0) target = $region41
    $region40: #{tpu_custom_call.1} parent=1 // pred_region
      %705 = dma.done [#allocation5], 16
    $region41: #{tpu_custom_call.1} parent=1 // pred_fallthru
      _
    %706 = vsyncpa [#allocation3], 1
    %707 = vsyncpa [#allocation5], 1

</llo_original>
